<compile_context>
chip_gen: v6e
topology: v6e:2x2x1
jax: 0.10.0
libtpu: 0.0.40
codegen_flags: <defaults>
</compile_context>

<pallas_src>
import jax
import jax.numpy as jnp
from jax.experimental import pallas as pl
from jax.experimental.pallas import tpu as pltpu

LANE = 128
SUBLANE = 8


def _round_up(x: int, m: int) -> int:
    return (x + m - 1) // m * m


def _linear_kernel(x_ref, wt_ref, b_ref, o_ref):
    # x arrives as f32; cast to the weight's compute dtype here (in-kernel,
    # on the VPU) instead of in a wrapper-side XLA convert pass.
    x = x_ref[...].astype(wt_ref.dtype)
    acc = jnp.dot(x, wt_ref[...], preferred_element_type=jnp.float32)
    o_ref[...] = (acc + b_ref[...]).astype(o_ref.dtype)


def prepare_params(weight, bias, compute_dtype=jnp.float32):
    """One-time parameter prep (do at init, NOT per forward call).

    Args:
      weight: (n_hidden, n_features) f32 -- PyTorch nn.Linear layout.
      bias:   (n_hidden,) f32
      compute_dtype: f32 matches PyTorch numerics; bf16 halves weight DMA.
    Returns:
      wt_padded:   (n_features, H_pad) compute_dtype, H_pad = round_up(H, 128)
      bias_padded: (1, H_pad) f32
      n_hidden:    original hidden size (for slicing the output back)
    """
    n_hidden, n_features = weight.shape
    h_pad = _round_up(n_hidden, LANE)
    wt = jnp.transpose(weight)                                   # (F, H), once
    wt = jnp.pad(wt, ((0, 0), (0, h_pad - n_hidden)))
    b2 = jnp.pad(bias, (0, h_pad - n_hidden)).reshape(1, h_pad)
    return wt.astype(compute_dtype), b2.astype(jnp.float32), n_hidden


def _vmem_capacity_bytes() -> int:
    try:
        cap = int(pltpu.get_tpu_info().vmem_capacity_bytes)
        if cap > 0:
            return cap
    except Exception:
        pass
    return 64 << 20  # conservative fallback (v7x per-TensorCore VMEM)


def _build_call(F, Hp, tm, grid_len, b_rows, out_dtype, vmem_limit, cost,
                use_pipeline_modes):
    if use_pipeline_modes:
        # Weight/bias have constant index_maps: single buffer (halves their
        # VMEM footprint, nothing to pipeline).  x: 3-deep input buffering.
        x_spec = pl.BlockSpec((tm, F), lambda i: (i, 0),
                              pipeline_mode=pl.Buffered(3))
        w_spec = pl.BlockSpec((F, Hp), lambda i: (0, 0),
                              pipeline_mode=pl.Buffered(1))
        b_spec = pl.BlockSpec((1, Hp), lambda i: (0, 0),
                              pipeline_mode=pl.Buffered(1))
    else:
        x_spec = pl.BlockSpec((tm, F), lambda i: (i, 0))
        w_spec = pl.BlockSpec((F, Hp), lambda i: (0, 0))
        b_spec = pl.BlockSpec((1, Hp), lambda i: (0, 0))

    return pl.pallas_call(
        _linear_kernel,
        out_shape=jax.ShapeDtypeStruct((b_rows, Hp), out_dtype),
        grid_spec=pltpu.PrefetchScalarGridSpec(
            num_scalar_prefetch=0,
            grid=(grid_len,),
            in_specs=[x_spec, w_spec, b_spec],
            out_specs=pl.BlockSpec((tm, Hp), lambda i: (i, 0)),
        ),
        compiler_params=pltpu.CompilerParams(
            dimension_semantics=("parallel",),
            vmem_limit_bytes=vmem_limit,
        ),
        cost_estimate=cost,
    )


def sum_sender_forward(x, wt_padded, bias_padded, n_hidden, *, tm=None,
                       out_dtype=jnp.float32, slice_output=True):
    """Equivalent of SumSender.forward(x, _aux_input) == fc1(x).

    Args:
      x:           (B, n_features) float32 (cast to compute dtype in-kernel)
      wt_padded:   (n_features, H_pad) from prepare_params
      bias_padded: (1, H_pad) f32 from prepare_params
      n_hidden:    true hidden size
      tm:          batch-tile rows (None = auto, VMEM-capacity aware)
      out_dtype:   set bf16 if the consumer accepts it (halves output HBM bytes)
      slice_output: False returns the (B_pad8, H_pad) lane-padded slab (no slice copy)
    """
    B, F = x.shape
    Hp = wt_padded.shape[1]
    w_bytes = jnp.dtype(wt_padded.dtype).itemsize
    x_bytes = jnp.dtype(x.dtype).itemsize
    o_bytes = jnp.dtype(out_dtype).itemsize

    # Pad batch only to the 8-row sublane granule; ragged last tiles are
    # handled by the cdiv grid (no tm-multiple over-padding).
    b_rows = _round_up(B, SUBLANE)
    if b_rows != B:
        x = jnp.pad(x, ((0, b_rows - B), (0, 0)))

    # ---- generation-aware tile size + VMEM budget ---------------------------
    vmem_cap = _vmem_capacity_bytes()              # 128 MiB v5e/v6e, 64 MiB v7x
    budget = vmem_cap - (8 << 20)                  # headroom for Mosaic internals
    # Conservative buffer counts (cover both Buffered(...) and fallback paths).
    fixed = 2 * F * Hp * w_bytes + 2 * Hp * 4      # resident weight + bias
    per_row = 3 * F * x_bytes + 2 * Hp * o_bytes   # pipelined x + out tiles
    tm_fit = max(SUBLANE, (budget - fixed) // max(per_row, 1))
    tm_req = int(tm) if tm is not None else 2048   # big tiles amortize ~0.35us/step
    tm_eff = min(tm_req, b_rows, int(tm_fit))
    tm_eff = max(SUBLANE, tm_eff // SUBLANE * SUBLANE)
    # Keep >= 2 grid steps when the batch allows it (feeds v7x's 2nd TensorCore).
    if b_rows // tm_eff < 2 and b_rows >= 2 * SUBLANE:
        tm_eff = max(SUBLANE, _round_up(pl.cdiv(b_rows, 2), SUBLANE))

    grid_len = pl.cdiv(b_rows, tm_eff)
    footprint = fixed + tm_eff * per_row
    vmem_limit = int(min(max(footprint + (8 << 20), 16 << 20), vmem_cap))

    cost = pl.CostEstimate(
        flops=2 * b_rows * F * Hp,
        transcendentals=0,
        bytes_accessed=(b_rows * F * x_bytes       # x (f32, cast in-kernel)
                        + F * Hp * w_bytes         # weight
                        + Hp * 4                   # bias
                        + b_rows * Hp * o_bytes),  # out
    )

    try:
        call = _build_call(F, Hp, tm_eff, grid_len, b_rows, out_dtype,
                           vmem_limit, cost, use_pipeline_modes=True)
        out = jax.block_until_ready(call(x, wt_padded, bias_padded))
    except Exception:
        # Fallback if this Pallas version rejects pl.Buffered(1)/(3): default
        # double-buffered pipeline (already covered by the VMEM estimate).
        call = _build_call(F, Hp, tm_eff, grid_len, b_rows, out_dtype,
                           vmem_limit, cost, use_pipeline_modes=False)
        out = call(x, wt_padded, bias_padded)

    if slice_output:
        # Consumers that can take the lane-padded (b_rows, Hp) slab should pass
        # slice_output=False and skip this extra XLA copy.
        return out[:B, :n_hidden]
    return out


if __name__ == "__main__":
    key = jax.random.PRNGKey(0)
    k_x, k_w, k_b, k_x2 = jax.random.split(key, 4)

    B, n_features, n_hidden = 8, 16, 32

    x = jax.random.normal(k_x, (B, n_features), dtype=jnp.float32)
    # PyTorch nn.Linear parameter layout: W (n_hidden, n_features), b (n_hidden,)
    weight = jax.random.normal(k_w, (n_hidden, n_features), dtype=jnp.float32) * 0.1
    bias = jax.random.normal(k_b, (n_hidden,), dtype=jnp.float32) * 0.1

    ref_f32 = x @ weight.T + bias

    # --- f32 weights: matches the PyTorch module's numerics -------------------
    wt_f32, b_pad, h = prepare_params(weight, bias, compute_dtype=jnp.float32)
    out_f32 = jax.block_until_ready(sum_sender_forward(x, wt_f32, b_pad, h))
    assert out_f32.shape == (B, n_hidden)
    assert jnp.allclose(out_f32, ref_f32, atol=1e-2, rtol=1e-2)

    # --- bf16 weights, x cast in-kernel: the DMA-halving fast path ------------
    wt_bf16, b_pad2, _ = prepare_params(weight, bias, compute_dtype=jnp.bfloat16)
    out_bf16 = jax.block_until_ready(sum_sender_forward(x, wt_bf16, b_pad2, h))
    ref_bf16 = (jnp.dot(x.astype(jnp.bfloat16), weight.T.astype(jnp.bfloat16),
                        preferred_element_type=jnp.float32) + bias)
    assert jnp.allclose(out_bf16, ref_bf16, atol=2e-3, rtol=2e-3)
    assert jnp.allclose(out_bf16, ref_f32, atol=3e-2, rtol=3e-2)

    # --- ragged batch (B not a tile multiple): exercises the cdiv grid --------
    B2 = 20
    x2 = jax.random.normal(k_x2, (B2, n_features), dtype=jnp.float32)
    out2 = jax.block_until_ready(sum_sender_forward(x2, wt_f32, b_pad, h, tm=16))
    ref2 = x2 @ weight.T + bias
    assert out2.shape == (B2, n_hidden)
    assert jnp.allclose(out2, ref2, atol=1e-2, rtol=1e-2)

    print("KERNEL_OK")
</pallas_src>

<mosaic_0001>
module attributes {stable_mosaic.version = 11 : i64} {
  func.func @_linear_kernel(%arg0: i32, %arg1: memref<8x16xf32, #tpu.memory_space<vmem>>, %arg2: memref<16x128xf32, #tpu.memory_space<vmem>>, %arg3: memref<1x128xf32, #tpu.memory_space<vmem>>, %arg4: memref<8x128xf32, #tpu.memory_space<vmem>>) attributes {dimension_semantics = [#tpu.dimension_semantics<parallel>], iteration_bounds = array<i64: 1>, scalar_prefetch = 0 : i64, scratch_operands = 0 : i64, tpu.core_type = #tpu.core_type<tc>, window_params = [{transform_indices = @transform_0, window_bounds = array<i64: 8, 16>}, {pipeline_mode = #tpu.pipeline_mode<synchronous>, transform_indices = @transform_1, window_bounds = array<i64: 16, 128>}, {pipeline_mode = #tpu.pipeline_mode<synchronous>, transform_indices = @transform_2, window_bounds = array<i64: 1, 128>}, {transform_indices = @transform_3, window_bounds = array<i64: 8, 128>}]} {
    %c0 = arith.constant 0 : index
    %c0_0 = arith.constant 0 : index
    %0 = vector.load %arg1[%c0, %c0_0] : memref<8x16xf32, #tpu.memory_space<vmem>>, vector<8x16xf32>
    %c0_1 = arith.constant 0 : index
    %c0_2 = arith.constant 0 : index
    %1 = vector.load %arg2[%c0_1, %c0_2] : memref<16x128xf32, #tpu.memory_space<vmem>>, vector<16x128xf32>
    %cst = arith.constant dense<0.000000e+00> : vector<8x128xf32>
    %2 = tpu.matmul %0, %1, %cst {dimension_numbers = #tpu.dot_dimension_numbers<[1], [0], [0], [1], [0, 0, 1, 1], [], []>} : vector<8x16xf32>, vector<16x128xf32>, vector<8x128xf32> -> vector<8x128xf32>
    %c0_3 = arith.constant 0 : index
    %c0_4 = arith.constant 0 : index
    %3 = vector.load %arg3[%c0_3, %c0_4] : memref<1x128xf32, #tpu.memory_space<vmem>>, vector<1x128xf32>
    %4 = vector.broadcast %3 : vector<1x128xf32> to vector<8x128xf32>
    %5 = arith.addf %2, %4 : vector<8x128xf32>
    %c0_5 = arith.constant 0 : index
    %c0_6 = arith.constant 0 : index
    %6 = vector.load %arg4[%c0_5, %c0_6] : memref<8x128xf32, #tpu.memory_space<vmem>>, vector<8x128xf32>
    tpu.vector_store %arg4[%c0_5, %c0_6], %5 {strides = array<i32>} : memref<8x128xf32, #tpu.memory_space<vmem>>, vector<8x128xf32>,
    return
  }
  func.func @transform_0(%arg0: i32) -> (i32, i32) {
    %c0_i32 = arith.constant 0 : i32
    %c0_i32_0 = arith.constant 0 : i32
    return %arg0, %c0_i32 : i32, i32
  }
  func.func @transform_1(%arg0: i32) -> (i32, i32) {
    %c0_i32 = arith.constant 0 : i32
    %c0_i32_0 = arith.constant 0 : i32
    %c0_i32_1 = arith.constant 0 : i32
    return %c0_i32, %c0_i32_0 : i32, i32
  }
  func.func @transform_2(%arg0: i32) -> (i32, i32) {
    %c0_i32 = arith.constant 0 : i32
    %c0_i32_0 = arith.constant 0 : i32
    %c0_i32_1 = arith.constant 0 : i32
    return %c0_i32, %c0_i32_0 : i32, i32
  }
  func.func @transform_3(%arg0: i32) -> (i32, i32) {
    %c0_i32 = arith.constant 0 : i32
    %c0_i32_0 = arith.constant 0 : i32
    return %arg0, %c0_i32 : i32, i32
  }
}

</mosaic_0001>

<llo_original>
// kernel: tpu_custom_call.1
$region0: #{tpu_custom_call.1}
  #allocation0 [shape = 'u32[]', space=smem, size = 0x4, offset = 0x4, fixed_abs, tag = 'smem constant byte address 0x4 - core index']
  #allocation1 [shape = 'u32[144,128]{1,0:T(1,128)}', space=vmem, size = 0x12000, scoped, tag = 'internal scratch']
  %s0 = inlined_call_operand.hbm [shape: f32[8,16], index: 0, kind: input, shape index: {}]
  %s1 = inlined_call_operand.hbm [shape: f32[16,128], index: 1, kind: input, shape index: {}]
  %s2 = inlined_call_operand.vmem [shape: f32[1,128], index: 2, kind: input, shape index: {}]
  %s3 = inlined_call_operand.hbm [shape: f32[8,128], index: 3, kind: output, shape index: {}]
  %s4 = sld [smem:[#allocation0]]
  $region30: #{tpu_custom_call.1} parent=0
    _
  %s6 = ssub.s32 1, %s4
  %s7 = scalar_select 0, %s6, %s4
  $region1: #{tpu_custom_call.1} parent=0
    #allocation2 [shape = 'u8[4096]{0}', space=vmem, size = 0x1000, scoped, tag = 'input window, operand 0, single buffered']
    #allocation3 [shape = 's32[1]{0}', space=sflag, size = 0x4, scoped, tag = 'scoped memory for tpu_custom_call.1']
    #allocation4 [shape = 's32[1]{0}', space=sflag, size = 0x4, scoped, tag = 'scoped memory for tpu_custom_call.1']
    #allocation5 [shape = 'u8[8192]{0}', space=vmem, size = 0x2000, scoped, tag = 'input window, operand 1, single buffered']
    #allocation6 [shape = 's32[1]{0}', space=sflag, size = 0x4, scoped, tag = 'scoped memory for tpu_custom_call.1']
    #allocation7 [shape = 'u8[4096]{0}', space=vmem, size = 0x1000, scoped, tag = 'output window, operand 0, single buffered']
    %8 = vsyncpa [#allocation3], 0
    %9 = vsyncpa [#allocation6], 0
    %10 = vsyncpa [#allocation4], 0
    // Predicated region
    $region2: #{tpu_custom_call.1} parent=1 // pred_check
      _
    $region3: #{tpu_custom_call.1} parent=1 // pred_check_branch
      %12 = sbr.rel (0) target = $region5
    $region4: #{tpu_custom_call.1} parent=1 // pred_region
      %s14 = ssub.s32 128, 128
      %15 = vsyncadd [#allocation3], %s14
      %s17 = sshll.u32 [#allocation2], 4
      %s18 = int_to_ptr.vmem [resolvable:$true] %s17
      %20 = dma.hbm_to_vmem [thread:$0]  %s0, 128, %s18, [#allocation3]
    $region5: #{tpu_custom_call.1} parent=1 // pred_fallthru
      _
    // Predicated region
    $region6: #{tpu_custom_call.1} parent=1 // pred_check
      _
    $region7: #{tpu_custom_call.1} parent=1 // pred_check_branch
      %22 = sbr.rel (0) target = $region9
    $region8: #{tpu_custom_call.1} parent=1 // pred_region
      %s24 = ssub.s32 256, 256
      %25 = vsyncadd [#allocation6], %s24
      %s26 = sshll.u32 [#allocation5], 4
      %s27 = int_to_ptr.vmem [resolvable:$true] %s26
      %32 = dma.hbm_to_vmem [thread:$0]  %s1, 256, %s27, [#allocation6], 128, 128, 8
    $region9: #{tpu_custom_call.1} parent=1 // pred_fallthru
      _
    // Predicated region
    $region10: #{tpu_custom_call.1} parent=1 // pred_check
      _
    $region11: #{tpu_custom_call.1} parent=1 // pred_check_branch
      %34 = sbr.rel (0) target = $region13
    $region12: #{tpu_custom_call.1} parent=1 // pred_region
      _
    $region13: #{tpu_custom_call.1} parent=1 // pred_fallthru
      _
    // Predicated region
    $region14: #{tpu_custom_call.1} parent=1 // pred_check
      _
    $region15: #{tpu_custom_call.1} parent=1 // pred_check_branch
      %36 = sbr.rel (0) target = $region17
    $region16: #{tpu_custom_call.1} parent=1 // pred_region
      %37 = dma.done [#allocation3], 128
    $region17: #{tpu_custom_call.1} parent=1 // pred_fallthru
      _
    // Predicated region
    $region18: #{tpu_custom_call.1} parent=1 // pred_check
      _
    $region19: #{tpu_custom_call.1} parent=1 // pred_check_branch
      %39 = sbr.rel (0) target = $region21
    $region20: #{tpu_custom_call.1} parent=1 // pred_region
      %40 = dma.done [#allocation6], 256
    $region21: #{tpu_custom_call.1} parent=1 // pred_fallthru
      _
    %v41 = vld [vmem:[#allocation2] sm:$0xff]
    %v42 = vld [vmem:[#allocation5] sm:$0xff]
    %v43 = vld [vmem:[#allocation5 + $0x8] sm:$0xff]
    %v44 = vld [vmem:[%s2] sm:$0x1]
    %v46 = vlaneseq
    %v47 = vshrl.u32 %v46, 7
    %v48 = vsub.s32 0, %v47
    %v49 = vrot.slane %v44, %v48
    %vm51 = vcmask 130048
    %v53 = vsel %vm51, %v41, 0
    %55 = vmatprep.subr.mxu0 0.0
    %56 = vmatpush1.msra.mxu0 0.0
    %57 = vmatprep.subr.mxu0 0.0
    %58 = vmatpush1.msra.mxu0 0.0
    %59 = vmatprep.subr.mxu0 0.0
    %60 = vmatpush1.msra.mxu0 0.0
    %61 = vmatprep.subr.mxu0 0.0
    %62 = vmatpush1.msra.mxu0 0.0
    %63 = vmatprep.subr.mxu0 0.0
    %64 = vmatpush1.msra.mxu0 0.0
    %65 = vmatprep.subr.mxu0 0.0
    %66 = vmatpush1.msra.mxu0 0.0
    %67 = vmatprep.subr.mxu0 0.0
    %68 = vmatpush1.msra.mxu0 0.0
    %69 = vmatprep.subr.mxu0 0.0
    %70 = vmatpush1.msra.mxu0 0.0
    %71 = vmatprep.subr.mxu0 0.0
    %72 = vmatpush1.msra.mxu0 0.0
    %73 = vmatprep.subr.mxu0 0.0
    %74 = vmatpush1.msra.mxu0 0.0
    %75 = vmatprep.subr.mxu0 0.0
    %76 = vmatpush1.msra.mxu0 0.0
    %77 = vmatprep.subr.mxu0 0.0
    %78 = vmatpush1.msra.mxu0 0.0
    %79 = vmatprep.subr.mxu0 0.0
    %80 = vmatpush1.msra.mxu0 0.0
    %81 = vmatprep.subr.mxu0 0.0
    %82 = vmatpush1.msra.mxu0 0.0
    %83 = vmatprep.subr.mxu0 0.0
    %84 = vmatpush1.msra.mxu0 %v43
    %85 = vmatprep.subr.mxu0 0.0
    %86 = vmatpush1.msra.mxu0 %v42
    %87 = vmatprep.subr.mxu0 0.0
    %88 = vmatpush2.msra.mxu0 0.0
    %89 = vmatprep.subr.mxu0 0.0
    %90 = vmatpush2.msra.mxu0 0.0
    %91 = vmatprep.subr.mxu0 0.0
    %92 = vmatpush2.msra.mxu0 0.0
    %93 = vmatprep.subr.mxu0 0.0
    %94 = vmatpush2.msra.mxu0 0.0
    %95 = vmatprep.subr.mxu0 0.0
    %96 = vmatpush2.msra.mxu0 0.0
    %97 = vmatprep.subr.mxu0 0.0
    %98 = vmatpush2.msra.mxu0 0.0
    %99 = vmatprep.subr.mxu0 0.0
    %100 = vmatpush2.msra.mxu0 0.0
    %101 = vmatprep.subr.mxu0 0.0
    %102 = vmatpush2.msra.mxu0 0.0
    %103 = vmatprep.subr.mxu0 0.0
    %104 = vmatpush2.msra.mxu0 0.0
    %105 = vmatprep.subr.mxu0 0.0
    %106 = vmatpush2.msra.mxu0 0.0
    %107 = vmatprep.subr.mxu0 0.0
    %108 = vmatpush2.msra.mxu0 0.0
    %109 = vmatprep.subr.mxu0 0.0
    %110 = vmatpush2.msra.mxu0 0.0
    %111 = vmatprep.subr.mxu0 0.0
    %112 = vmatpush2.msra.mxu0 0.0
    %113 = vmatprep.subr.mxu0 0.0
    %114 = vmatpush2.msra.mxu0 0.0
    %115 = vmatprep.subr.mxu0 0.0
    %116 = vmatpush2.msra.mxu0 0.0
    %117 = vmatprep.subr.mxu0 0.0
    %118 = vmatpush2.msra.mxu0 0.0
    %119 = vmatprep.mubr.f32.mxu0 0.0
    %120 = vmatmul.mubr.f32.gmra.mxu0 %v53
    %v121 = vpop.f32.mrf.mxu0
    %v122 = vadd.f32 %v49, %v121
    %v123 = vpop.f32.mrf.mxu0
    %124 = vdwg.mxu0
    %125 = vst [vmem:[#allocation7] sm:$0xff] %v122
    // Predicated region
    $region22: #{tpu_custom_call.1} parent=1 // pred_check
      _
    $region23: #{tpu_custom_call.1} parent=1 // pred_check_branch
      %127 = sbr.rel (0) target = $region25
    $region24: #{tpu_custom_call.1} parent=1 // pred_region
      %s129 = ssub.s32 128, 128
      %130 = vsyncadd [#allocation4], %s129
      %s132 = sshll.u32 [#allocation7], 4
      %s133 = int_to_ptr.vmem [resolvable:$true] %s132
      %135 = dma.vmem_to_hbm [thread:$0]  %s133, 128, %s3, [#allocation4]
    $region25: #{tpu_custom_call.1} parent=1 // pred_fallthru
      _
    // Predicated region
    $region26: #{tpu_custom_call.1} parent=1 // pred_check
      _
    $region27: #{tpu_custom_call.1} parent=1 // pred_check_branch
      %137 = sbr.rel (0) target = $region29
    $region28: #{tpu_custom_call.1} parent=1 // pred_region
      %138 = dma.done [#allocation4], 128
    $region29: #{tpu_custom_call.1} parent=1 // pred_fallthru
      _
    %139 = vsyncpa [#allocation3], 1
    %140 = vsyncpa [#allocation6], 1
    %141 = vsyncpa [#allocation4], 1

</llo_original>
